<compile_context>
chip_gen: v5e
topology: v5e:2x2
jax: 0.10.0
libtpu: 0.0.40
codegen_flags: <defaults>
</compile_context>

<pallas_src>
import math

import jax
import jax.numpy as jnp
from jax import lax
from jax.experimental import pallas as pl
from jax.experimental.pallas import tpu as pltpu


def make_mqa_kernel(num_heads: int, head_size: int, block_q: int, seq_len: int,
                    scale: float, compute_dtype):
    def kernel(xq_ref, k_ref, v_ref, mask_ref, wqT_ref, woT_ref, ctx_ref, scores_ref):
        cdt = compute_dtype
        xq = xq_ref[0]                          # (block_q, head_size) query rows
        k = k_ref[0].astype(cdt)                # (seq_len, head_size), shared by all heads
        v = v_ref[0].astype(cdt)                # (seq_len, head_size)
        m = mask_ref[0]                         # (1, seq_len) additive mask, f32

        # --- Q projection (one MXU matmul); fold 1/sqrt(d) into q once instead of
        #     scaling every (block_q, seq) score tile. ---
        q = jnp.dot(xq, wqT_ref[...], preferred_element_type=jnp.float32) * scale
        q = q.astype(cdt)                       # (block_q, hidden)

        # --- Head-major repack as an in-value concatenate: (block_q, H*d) ->
        #     (H*block_q, d).  No VMEM scratch roundtrip, no masked partial stores. ---
        qhm = jnp.concatenate(
            [q[:, h * head_size:(h + 1) * head_size] for h in range(num_heads)],
            axis=0)

        # --- Scores for ALL heads in one matmul, contracting over head_size
        #     (K/V are shared across heads -> multi-query; no explicit k.T copy). ---
        s = lax.dot_general(qhm, k,
                            dimension_numbers=(((1,), (1,)), ((), ())),
                            preferred_element_type=jnp.float32)   # (H*block_q, seq)
        s = s + m                                                   # broadcasts over rows

        # --- One lane-dense slab store for the whole scores block (the HBM-bound part
        #     of this kernel at BERT scale; writeback can start early). ---
        scores_ref[0] = s.reshape(num_heads, block_q, seq_len).astype(scores_ref.dtype)

        # --- Context for ALL heads in one matmul, fed from the resident scores output
        #     block so no duplicate (H*block_q, seq) f32 temporary stays live. ---
        p = scores_ref[0].reshape(num_heads * block_q, seq_len).astype(cdt)
        ctx = jnp.dot(p, v, preferred_element_type=jnp.float32)    # (H*block_q, d)
        ctx = ctx.astype(cdt)

        # --- Un-permute heads back next to the feature axis (in-value lane concat),
        #     then the output projection as one matmul with full K = hidden depth. ---
        ctx_flat = jnp.concatenate(
            [ctx[h * block_q:(h + 1) * block_q, :] for h in range(num_heads)],
            axis=1)                                                 # (block_q, hidden)
        ctx_ref[0] = jnp.dot(ctx_flat, woT_ref[...],
                             preferred_element_type=jnp.float32).astype(ctx_ref.dtype)

    return kernel


def _vmem_capacity_bytes() -> int:
    try:
        info = pltpu.get_tpu_info()
        cap = getattr(info, "vmem_capacity_bytes", None)
        if cap:
            return int(cap)
    except Exception:
        pass
    return 64 << 20   # conservative fallback (v7x per-TC size)


def multi_query_attention(hidden_states, wq, wk, wv, wo, attention_mask=None, *,
                          num_heads: int, block_q=None,
                          compute_dtype=jnp.float32,
                          scores_dtype=jnp.float32,
                          single_buffer_weights=None):
    """Pallas implementation of MultiQueryAttention.forward.

    hidden_states: (bs, seq_len, head_size) f32
    wq: (hidden, head_size)   wk, wv: (head_size, head_size)   wo: (hidden, hidden)
    attention_mask: None or (bs, 1, 1, seq_len) additive mask.
    Returns (context (bs, seq, hidden) f32, scores (bs, H, seq, seq) scores_dtype).

    Performance knobs: scores_dtype=bf16 ~halves the dominant HBM writeback;
    compute_dtype=bf16 is recommended on v5e/v6e/v7x for MXU operands (f32 accumulate).
    """
    bs, seq_len, head_size = hidden_states.shape
    hidden_size = num_heads * head_size
    assert wq.shape == (hidden_size, head_size)
    assert wk.shape == (head_size, head_size)
    assert wv.shape == (head_size, head_size)
    assert wo.shape == (hidden_size, hidden_size)

    c_bytes = jnp.dtype(compute_dtype).itemsize
    s_bytes = jnp.dtype(scores_dtype).itemsize

    # --- Hoist the shared K/V projections out of the per-query-block grid (tiny XLA
    #     matmuls); the kernel would otherwise recompute them num_q_blocks times. ---
    x32 = hidden_states.astype(jnp.float32)
    k_full = jnp.einsum('bsd,ed->bse', x32, wk.astype(jnp.float32)).astype(compute_dtype)
    v_full = jnp.einsum('bsd,ed->bse', x32, wv.astype(jnp.float32)).astype(compute_dtype)
    xq = hidden_states.astype(compute_dtype)
    wqT = wq.T.astype(compute_dtype)
    woT = wo.T.astype(compute_dtype)

    if attention_mask is None:
        mask3 = jnp.zeros((bs, 1, seq_len), jnp.float32)
    else:
        assert attention_mask.shape == (bs, 1, 1, seq_len), attention_mask.shape
        mask3 = attention_mask.reshape(bs, 1, seq_len).astype(jnp.float32)

    if single_buffer_weights is None:
        # Double-buffering tiny weights costs nothing; single-buffer once they matter.
        single_buffer_weights = (wqT.size + woT.size) * c_bytes >= (1 << 20)
    single_buffer_weights = bool(single_buffer_weights) and hasattr(pl, "Buffered")

    # --- VMEM-aware query-block tiling: estimate the per-step resident set
    #     (double-buffered pipeline blocks + weights + live temporaries) and pick the
    #     largest block_q that fits with headroom. ---
    w_factor = 1 if single_buffer_weights else 2
    weight_bytes = w_factor * (head_size * hidden_size
                               + hidden_size * hidden_size) * c_bytes

    def est_vmem(bq):
        blocks = 2 * (bq * head_size * c_bytes                     # xq block
                      + 2 * seq_len * head_size * c_bytes          # k, v blocks
                      + seq_len * 4                                # mask block
                      + bq * hidden_size * 4                       # ctx out block (f32)
                      + num_heads * bq * seq_len * s_bytes)        # scores out block
        temps = (num_heads * bq * seq_len * (4 + c_bytes)          # s (f32) + p (cdt)
                 + num_heads * bq * head_size * (4 + c_bytes)      # ctx acc + cast
                 + bq * hidden_size * (4 + c_bytes))               # ctx_flat + out
        return blocks + weight_bytes + temps

    vmem_cap = _vmem_capacity_bytes()
    vmem_budget = max(vmem_cap - (16 << 20), 32 << 20)   # leave compiler headroom

    if block_q is None:
        cands = [seq_len] + [c for c in (1024, 512, 256, 128, 64, 32, 16, 8)
                             if c < seq_len and seq_len % c == 0]
        block_q = cands[-1]
        for cand in cands:
            if est_vmem(cand) <= vmem_budget:
                block_q = cand
                break
    assert seq_len % block_q == 0 and (block_q == seq_len or block_q % 8 == 0)
    num_q_blocks = seq_len // block_q

    vmem_limit = int(min(max(est_vmem(block_q) + (8 << 20), 32 << 20), vmem_budget))

    def _resident_spec(shape):
        idx = lambda b, qi: (0,) * len(shape)
        if single_buffer_weights:
            # Constant index map -> the second buffer is dead VMEM; single-buffer it.
            return pl.BlockSpec(shape, idx, pipeline_mode=pl.Buffered(1))
        return pl.BlockSpec(shape, idx)

    # Advisory cost estimate: tells XLA the kernel is dominated by the scores writeback.
    flops = (2 * bs * seq_len * head_size * hidden_size
             + 4 * bs * num_heads * seq_len * seq_len * head_size
             + 2 * bs * seq_len * hidden_size * hidden_size)
    bytes_accessed = (3 * bs * seq_len * head_size * c_bytes
                      + bs * seq_len * 4
                      + (head_size * hidden_size + hidden_size * hidden_size) * c_bytes
                      + bs * seq_len * hidden_size * 4
                      + bs * num_heads * seq_len * seq_len * s_bytes)
    cost = pl.CostEstimate(flops=int(flops), transcendentals=0,
                           bytes_accessed=int(bytes_accessed))

    kernel = make_mqa_kernel(num_heads, head_size, block_q, seq_len,
                             1.0 / math.sqrt(head_size), compute_dtype)

    out_shapes = (
        jax.ShapeDtypeStruct((bs, seq_len, hidden_size), jnp.float32),
        jax.ShapeDtypeStruct((bs, num_heads, seq_len, seq_len), scores_dtype),
    )

    ctx, scores = pl.pallas_call(
        kernel,
        out_shape=out_shapes,
        grid_spec=pltpu.PrefetchScalarGridSpec(
            num_scalar_prefetch=0,
            grid=(bs, num_q_blocks),
            in_specs=[
                pl.BlockSpec((1, block_q, head_size), lambda b, qi: (b, qi, 0)),  # x -> Q
                pl.BlockSpec((1, seq_len, head_size), lambda b, qi: (b, 0, 0)),   # k
                pl.BlockSpec((1, seq_len, head_size), lambda b, qi: (b, 0, 0)),   # v
                pl.BlockSpec((1, 1, seq_len), lambda b, qi: (b, 0, 0)),           # mask
                _resident_spec((head_size, hidden_size)),                         # Wq^T
                _resident_spec((hidden_size, hidden_size)),                       # Wo^T
            ],
            out_specs=[
                pl.BlockSpec((1, block_q, hidden_size), lambda b, qi: (b, qi, 0)),
                pl.BlockSpec((1, num_heads, block_q, seq_len),
                             lambda b, qi: (b, 0, qi, 0)),
            ],
        ),
        compiler_params=pltpu.CompilerParams(
            dimension_semantics=("parallel", "parallel"),
            vmem_limit_bytes=vmem_limit,
        ),
        cost_estimate=cost,
    )(xq, k_full, v_full, mask3, wqT, woT)
    return ctx, scores


def reference(x, wq, wk, wv, wo, mask, num_heads):
    """Pure-JAX transcription of the PyTorch forward (no softmax, as written)."""
    bs, seq, hd = x.shape
    hidden = num_heads * hd
    q = x @ wq.T                                     # (bs, seq, hidden)
    k = x @ wk.T                                     # (bs, seq, hd)
    v = x @ wv.T
    q = q.reshape(bs, seq, num_heads, hd).transpose(0, 2, 1, 3)   # (bs, H, seq, hd)
    k = k[:, None]                                    # (bs, 1, seq, hd)
    v = v[:, None]
    s = jnp.einsum('bhqd,bhkd->bhqk', q, k) / math.sqrt(hd)
    if mask is not None:
        s = s + mask
    ctx = jnp.einsum('bhqk,bhkd->bhqd', s, v)         # (bs, H, seq, hd)
    ctx = ctx.transpose(0, 2, 1, 3).reshape(bs, seq, hidden)
    ctx = ctx @ wo.T
    return ctx, s


if __name__ == "__main__":
    bs, seq_len = 2, 8
    num_heads, head_size = 4, 8
    hidden_size = num_heads * head_size               # 32

    key = jax.random.PRNGKey(0)
    kx, kq, kk, kv, ko = jax.random.split(key, 5)

    hidden_states = jax.random.normal(kx, (bs, seq_len, head_size), jnp.float32)

    # nn.Linear(in, out, bias=False) weight is (out, in); init uniform(+-1/sqrt(in)).
    bq = 1.0 / math.sqrt(head_size)
    wq = jax.random.uniform(kq, (hidden_size, head_size), jnp.float32, -bq, bq)
    wk = jax.random.uniform(kk, (head_size, head_size), jnp.float32, -bq, bq)
    wv = jax.random.uniform(kv, (head_size, head_size), jnp.float32, -bq, bq)
    bo = 1.0 / math.sqrt(hidden_size)
    wo = jax.random.uniform(ko, (hidden_size, hidden_size), jnp.float32, -bo, bo)

    # BERT-style additive mask: batch 1 has its last 2 positions masked out.
    mask = jnp.zeros((bs, 1, 1, seq_len), jnp.float32)
    mask = mask.at[1, 0, 0, -2:].set(-10000.0)

    ctx, scores = multi_query_attention(hidden_states, wq, wk, wv, wo, mask,
                                        num_heads=num_heads)
    jax.block_until_ready((ctx, scores))

    ctx_ref, scores_ref = reference(hidden_states, wq, wk, wv, wo, mask, num_heads)

    assert ctx.shape == (bs, seq_len, hidden_size)
    assert scores.shape == (bs, num_heads, seq_len, seq_len)
    assert jnp.allclose(ctx, ctx_ref, atol=1e-4, rtol=1e-4)
    assert jnp.allclose(scores, scores_ref, atol=1e-4, rtol=1e-4)

    print("KERNEL_OK")
</pallas_src>

<mosaic_0001>
module attributes {stable_mosaic.version = 11 : i64} {
  func.func @kernel(%arg0: i32, %arg1: i32, %arg2: memref<1x8x8xf32, #tpu.memory_space<vmem>>, %arg3: memref<1x8x8xf32, #tpu.memory_space<vmem>>, %arg4: memref<1x8x8xf32, #tpu.memory_space<vmem>>, %arg5: memref<1x1x8xf32, #tpu.memory_space<vmem>>, %arg6: memref<8x32xf32, #tpu.memory_space<vmem>>, %arg7: memref<32x32xf32, #tpu.memory_space<vmem>>, %arg8: memref<1x8x32xf32, #tpu.memory_space<vmem>>, %arg9: memref<1x4x8x8xf32, #tpu.memory_space<vmem>>) attributes {dimension_semantics = [#tpu.dimension_semantics<parallel>, #tpu.dimension_semantics<parallel>], iteration_bounds = array<i64: 2, 1>, scalar_prefetch = 0 : i64, scratch_operands = 0 : i64, tpu.core_type = #tpu.core_type<tc>, window_params = [{transform_indices = @transform_0, window_bounds = array<i64: 1, 8, 8>}, {transform_indices = @transform_1, window_bounds = array<i64: 1, 8, 8>}, {transform_indices = @transform_2, window_bounds = array<i64: 1, 8, 8>}, {transform_indices = @transform_3, window_bounds = array<i64: 1, 1, 8>}, {pipeline_mode = #tpu.pipeline_mode<synchronous>, transform_indices = @transform_4, window_bounds = array<i64: 8, 32>}, {pipeline_mode = #tpu.pipeline_mode<synchronous>, transform_indices = @transform_5, window_bounds = array<i64: 32, 32>}, {transform_indices = @transform_6, window_bounds = array<i64: 1, 8, 32>}, {transform_indices = @transform_7, window_bounds = array<i64: 1, 4, 8, 8>}]} {
    %c0 = arith.constant 0 : index
    %c0_0 = arith.constant 0 : index
    %c0_1 = arith.constant 0 : index
    %0 = vector.load %arg2[%c0, %c0_0, %c0_1] : memref<1x8x8xf32, #tpu.memory_space<vmem>>, vector<1x8x8xf32>
    %1 = vector.shape_cast %0 : vector<1x8x8xf32> to vector<8x8xf32>
    %c0_2 = arith.constant 0 : index
    %c0_3 = arith.constant 0 : index
    %c0_4 = arith.constant 0 : index
    %2 = vector.load %arg3[%c0_2, %c0_3, %c0_4] : memref<1x8x8xf32, #tpu.memory_space<vmem>>, vector<1x8x8xf32>
    %3 = vector.shape_cast %2 : vector<1x8x8xf32> to vector<8x8xf32>
    %c0_5 = arith.constant 0 : index
    %c0_6 = arith.constant 0 : index
    %c0_7 = arith.constant 0 : index
    %4 = vector.load %arg4[%c0_5, %c0_6, %c0_7] : memref<1x8x8xf32, #tpu.memory_space<vmem>>, vector<1x8x8xf32>
    %5 = vector.shape_cast %4 : vector<1x8x8xf32> to vector<8x8xf32>
    %c0_8 = arith.constant 0 : index
    %c0_9 = arith.constant 0 : index
    %c0_10 = arith.constant 0 : index
    %6 = vector.load %arg5[%c0_8, %c0_9, %c0_10] : memref<1x1x8xf32, #tpu.memory_space<vmem>>, vector<1x1x8xf32>
    %7 = vector.shape_cast %6 : vector<1x1x8xf32> to vector<1x8xf32>
    %c0_11 = arith.constant 0 : index
    %c0_12 = arith.constant 0 : index
    %8 = vector.load %arg6[%c0_11, %c0_12] : memref<8x32xf32, #tpu.memory_space<vmem>>, vector<8x32xf32>
    %cst = arith.constant dense<0.000000e+00> : vector<8x32xf32>
    %9 = tpu.matmul %1, %8, %cst {dimension_numbers = #tpu.dot_dimension_numbers<[1], [0], [0], [1], [0, 0, 1, 1], [], []>} : vector<8x8xf32>, vector<8x32xf32>, vector<8x32xf32> -> vector<8x32xf32>
    %cst_13 = arith.constant 0.353553385 : f32
    %10 = vector.broadcast %cst_13 : f32 to vector<8x32xf32>
    %11 = arith.mulf %9, %10 : vector<8x32xf32>
    %12 = vector.extract_strided_slice %11 {offsets = [0, 0], sizes = [8, 8], strides = [1, 1]} : vector<8x32xf32> to vector<8x8xf32>
    %13 = vector.extract_strided_slice %11 {offsets = [0, 8], sizes = [8, 8], strides = [1, 1]} : vector<8x32xf32> to vector<8x8xf32>
    %14 = vector.extract_strided_slice %11 {offsets = [0, 16], sizes = [8, 8], strides = [1, 1]} : vector<8x32xf32> to vector<8x8xf32>
    %15 = vector.extract_strided_slice %11 {offsets = [0, 24], sizes = [8, 8], strides = [1, 1]} : vector<8x32xf32> to vector<8x8xf32>
    %16 = tpu.concatenate %12, %13, %14, %15 in 0 : vector<8x8xf32>, vector<8x8xf32>, vector<8x8xf32>, vector<8x8xf32> -> vector<32x8xf32>
    %cst_14 = arith.constant dense<0.000000e+00> : vector<32x8xf32>
    %17 = tpu.matmul %16, %3, %cst_14 {dimension_numbers = #tpu.dot_dimension_numbers<[1], [1], [0], [0], [0, 0, 1, 0], [], []>} : vector<32x8xf32>, vector<8x8xf32>, vector<32x8xf32> -> vector<32x8xf32>
    %18 = vector.broadcast %7 : vector<1x8xf32> to vector<32x8xf32>
    %19 = arith.addf %17, %18 : vector<32x8xf32>
    %20 = vector.shape_cast %19 : vector<32x8xf32> to vector<4x8x8xf32>
    %c0_15 = arith.constant 0 : index
    %c0_16 = arith.constant 0 : index
    %c0_17 = arith.constant 0 : index
    %c0_18 = arith.constant 0 : index
    %21 = vector.load %arg9[%c0_15, %c0_16, %c0_17, %c0_18] : memref<1x4x8x8xf32, #tpu.memory_space<vmem>>, vector<1x4x8x8xf32>
    %22 = vector.shape_cast %21 : vector<1x4x8x8xf32> to vector<4x8x8xf32>
    %23 = vector.shape_cast %20 : vector<4x8x8xf32> to vector<1x4x8x8xf32>
    tpu.vector_store %arg9[%c0_15, %c0_16, %c0_17, %c0_18], %23 {strides = array<i32>} : memref<1x4x8x8xf32, #tpu.memory_space<vmem>>, vector<1x4x8x8xf32>,
    %c0_19 = arith.constant 0 : index
    %c0_20 = arith.constant 0 : index
    %c0_21 = arith.constant 0 : index
    %c0_22 = arith.constant 0 : index
    %24 = vector.load %arg9[%c0_19, %c0_20, %c0_21, %c0_22] : memref<1x4x8x8xf32, #tpu.memory_space<vmem>>, vector<1x4x8x8xf32>
    %25 = vector.shape_cast %24 : vector<1x4x8x8xf32> to vector<4x8x8xf32>
    %26 = vector.shape_cast %25 : vector<4x8x8xf32> to vector<32x8xf32>
    %cst_23 = arith.constant dense<0.000000e+00> : vector<32x8xf32>
    %27 = tpu.matmul %26, %5, %cst_23 {dimension_numbers = #tpu.dot_dimension_numbers<[1], [0], [0], [1], [0, 0, 1, 1], [], []>} : vector<32x8xf32>, vector<8x8xf32>, vector<32x8xf32> -> vector<32x8xf32>
    %28 = vector.extract_strided_slice %27 {offsets = [0, 0], sizes = [8, 8], strides = [1, 1]} : vector<32x8xf32> to vector<8x8xf32>
    %29 = vector.extract_strided_slice %27 {offsets = [8, 0], sizes = [8, 8], strides = [1, 1]} : vector<32x8xf32> to vector<8x8xf32>
    %30 = vector.extract_strided_slice %27 {offsets = [16, 0], sizes = [8, 8], strides = [1, 1]} : vector<32x8xf32> to vector<8x8xf32>
    %31 = vector.extract_strided_slice %27 {offsets = [24, 0], sizes = [8, 8], strides = [1, 1]} : vector<32x8xf32> to vector<8x8xf32>
    %32 = tpu.concatenate %28, %29, %30, %31 in 1 : vector<8x8xf32>, vector<8x8xf32>, vector<8x8xf32>, vector<8x8xf32> -> vector<8x32xf32>
    %c0_24 = arith.constant 0 : index
    %c0_25 = arith.constant 0 : index
    %33 = vector.load %arg7[%c0_24, %c0_25] : memref<32x32xf32, #tpu.memory_space<vmem>>, vector<32x32xf32>
    %cst_26 = arith.constant dense<0.000000e+00> : vector<8x32xf32>
    %34 = tpu.matmul %32, %33, %cst_26 {dimension_numbers = #tpu.dot_dimension_numbers<[1], [0], [0], [1], [0, 0, 1, 1], [], []>} : vector<8x32xf32>, vector<32x32xf32>, vector<8x32xf32> -> vector<8x32xf32>
    %c0_27 = arith.constant 0 : index
    %c0_28 = arith.constant 0 : index
    %c0_29 = arith.constant 0 : index
    %35 = vector.load %arg8[%c0_27, %c0_28, %c0_29] : memref<1x8x32xf32, #tpu.memory_space<vmem>>, vector<1x8x32xf32>
    %36 = vector.shape_cast %35 : vector<1x8x32xf32> to vector<8x32xf32>
    %37 = vector.shape_cast %34 : vector<8x32xf32> to vector<1x8x32xf32>
    tpu.vector_store %arg8[%c0_27, %c0_28, %c0_29], %37 {strides = array<i32>} : memref<1x8x32xf32, #tpu.memory_space<vmem>>, vector<1x8x32xf32>,
    return
  }
  func.func @transform_0(%arg0: i32, %arg1: i32) -> (i32, i32, i32) {
    %c0_i32 = arith.constant 0 : i32
    %c0_i32_0 = arith.constant 0 : i32
    return %arg0, %arg1, %c0_i32 : i32, i32, i32
  }
  func.func @transform_1(%arg0: i32, %arg1: i32) -> (i32, i32, i32) {
    %c0_i32 = arith.constant 0 : i32
    %c0_i32_0 = arith.constant 0 : i32
    %c0_i32_1 = arith.constant 0 : i32
    return %arg0, %c0_i32, %c0_i32_0 : i32, i32, i32
  }
  func.func @transform_2(%arg0: i32, %arg1: i32) -> (i32, i32, i32) {
    %c0_i32 = arith.constant 0 : i32
    %c0_i32_0 = arith.constant 0 : i32
    %c0_i32_1 = arith.constant 0 : i32
    return %arg0, %c0_i32, %c0_i32_0 : i32, i32, i32
  }
  func.func @transform_3(%arg0: i32, %arg1: i32) -> (i32, i32, i32) {
    %c0_i32 = arith.constant 0 : i32
    %c0_i32_0 = arith.constant 0 : i32
    %c0_i32_1 = arith.constant 0 : i32
    return %arg0, %c0_i32, %c0_i32_0 : i32, i32, i32
  }
  func.func @transform_4(%arg0: i32, %arg1: i32) -> (i32, i32) {
    %c0_i32 = arith.constant 0 : i32
    %c0_i32_0 = arith.constant 0 : i32
    %c0_i32_1 = arith.constant 0 : i32
    return %c0_i32, %c0_i32_0 : i32, i32
  }
  func.func @transform_5(%arg0: i32, %arg1: i32) -> (i32, i32) {
    %c0_i32 = arith.constant 0 : i32
    %c0_i32_0 = arith.constant 0 : i32
    %c0_i32_1 = arith.constant 0 : i32
    return %c0_i32, %c0_i32_0 : i32, i32
  }
  func.func @transform_6(%arg0: i32, %arg1: i32) -> (i32, i32, i32) {
    %c0_i32 = arith.constant 0 : i32
    %c0_i32_0 = arith.constant 0 : i32
    return %arg0, %arg1, %c0_i32 : i32, i32, i32
  }
  func.func @transform_7(%arg0: i32, %arg1: i32) -> (i32, i32, i32, i32) {
    %c0_i32 = arith.constant 0 : i32
    %c0_i32_0 = arith.constant 0 : i32
    %c0_i32_1 = arith.constant 0 : i32
    return %arg0, %c0_i32, %arg1, %c0_i32_0 : i32, i32, i32, i32
  }
}

</mosaic_0001>

<llo_original>
// kernel: tpu_custom_call.1
$region0: #{tpu_custom_call.1}
  #allocation0 [shape = 'u32[]', space=smem, size = 0x4, offset = 0x4, fixed_abs, tag = 'smem constant byte address 0x4 - core index']
  #allocation1 [shape = 'u32[72,128]{1,0:T(1,128)}', space=vmem, size = 0x9000, scoped, tag = 'internal scratch']
  %s0 = inlined_call_operand.hbm [shape: f32[2,8,8], index: 0, kind: input, shape index: {}]
  %s1 = inlined_call_operand.hbm [shape: f32[2,8,8], index: 1, kind: input, shape index: {}]
  %s2 = inlined_call_operand.hbm [shape: f32[2,8,8], index: 2, kind: input, shape index: {}]
  %s3 = inlined_call_operand.vmem [shape: f32[2,1,8], index: 3, kind: input, shape index: {}]
  %s4 = inlined_call_operand.hbm [shape: f32[8,32], index: 4, kind: input, shape index: {}]
  %s5 = inlined_call_operand.hbm [shape: f32[32,32], index: 5, kind: input, shape index: {}]
  %s6 = inlined_call_operand.hbm [shape: f32[2,8,32], index: 6, kind: output, shape index: {0}]
  %s7 = inlined_call_operand.hbm [shape: f32[2,4,8,8], index: 7, kind: output, shape index: {1}]
  %8 = xla_tuple %s6, %s7
  %s9 = sld [smem:[#allocation0]]
  $region85: #{tpu_custom_call.1} parent=0
    _
  %s11 = ssub.s32 1, %s9
  %s12 = scalar_select 0, %s11, %s9
  $region1: #{tpu_custom_call.1} parent=0
    #allocation2 [shape = 'u8[8192]{0}', space=vmem, size = 0x2000, scoped, tag = 'input window, operand 0']
    #allocation3 [shape = 's32[2]{0}', space=sflag, size = 0x8, scoped, tag = 'scoped memory for tpu_custom_call.1']
    #allocation4 [shape = 's32[2]{0}', space=sflag, size = 0x8, scoped, tag = 'scoped memory for tpu_custom_call.1']
    #allocation5 [shape = 'u8[8192]{0}', space=vmem, size = 0x2000, scoped, tag = 'input window, operand 1']
    #allocation6 [shape = 's32[2]{0}', space=sflag, size = 0x8, scoped, tag = 'scoped memory for tpu_custom_call.1']
    #allocation7 [shape = 'u8[8192]{0}', space=vmem, size = 0x2000, scoped, tag = 'input window, operand 2']
    #allocation8 [shape = 'u8[4096]{0}', space=vmem, size = 0x1000, scoped, tag = 'input window, operand 4, single buffered']
    #allocation9 [shape = 's32[1]{0}', space=sflag, size = 0x4, scoped, tag = 'scoped memory for tpu_custom_call.1']
    #allocation10 [shape = 'u8[16384]{0}', space=vmem, size = 0x4000, scoped, tag = 'input window, operand 5, single buffered']
    #allocation11 [shape = 'u8[8192]{0}', space=vmem, size = 0x2000, scoped, tag = 'output window, operand 0']
    #allocation12 [shape = 'u8[32768]{0}', space=vmem, size = 0x8000, scoped, tag = 'output window, operand 1']
    #allocation13 [shape = 's32[2]{0}', space=sflag, size = 0x8, scoped, tag = 'scoped memory for tpu_custom_call.1']
    %13 = vsyncpa [#allocation3], 0
    %s14 = scalar_lea.sflag [#allocation3], 1
    %15 = vsyncpa %s14, 0
    %16 = vsyncpa [#allocation6], 0
    %s17 = scalar_lea.sflag [#allocation6], 1
    %18 = vsyncpa %s17, 0
    %19 = vsyncpa [#allocation9], 0
    %20 = vsyncpa [#allocation4], 0
    %s21 = scalar_lea.sflag [#allocation4], 1
    %22 = vsyncpa %s21, 0
    %23 = vsyncpa [#allocation13], 0
    %s24 = scalar_lea.sflag [#allocation13], 1
    %25 = vsyncpa %s24, 0
    loop: start=0, step=1, limit=4
    $region2: #{tpu_custom_call.1} parent=1 // loop_pre_header
      _
    $region3: #{tpu_custom_call.1} parent=1 // loop_header
      %s27 = sphi 0, %s31
      %p28 = scmp.ge.s32.totalorder %s27, 4
      %s34 = sphi 0, %s46
      %s35 = sphi 0, %s42
      %s36 = sphi 0, %s34
      %s37 = sphi 0, %s35
      %s38 = sphi 0, %s36
      %s39 = sphi 0, %s37
      %s51 = sphi 0, %s53
      %s54 = sphi 0, %s51
      %s55 = sphi 0, %s54
      %s71 = sphi 0, %s55
      %s77 = sphi 0, %s79
      %s80 = sphi 0, %s77
      %s81 = sphi 0, %s80
      %s97 = sphi 0, %s81
      %s103 = sphi 0, %s105
      %s106 = sphi 0, %s103
      %s107 = sphi 0, %s106
      %s123 = sphi 0, %s107
      %s129 = sphi 0, %s131
      %s132 = sphi 0, %s129
      %s133 = sphi 0, %s132
      %s149 = sphi 0, %s133
      %s153 = sphi 0, %s153
      %s155 = sphi 0, %s153
      %s156 = sphi 0, %s155
      %s170 = sphi 0, %s156
      %s174 = sphi 0, %s174
      %s176 = sphi 0, %s174
      %s177 = sphi 0, %s176
      %s191 = sphi 0, %s177
      %s199 = sphi 0, %s201
      %s202 = sphi 0, %s199
      %s203 = sphi 0, %s202
      %s219 = sphi 0, %s203
      %s227 = sphi 0, %s229
      %s230 = sphi 0, %s227
      %s231 = sphi 0, %s230
      %s247 = sphi 0, %s231
    $region4: #{tpu_custom_call.1} parent=1 // loop_header_branch
      %30 = sbr.rel (%p28) target = $region8
    $region5: #{tpu_custom_call.1} parent=1 // loop_body
      %s32 = ssub.s32 %s27, 1
      %s33 = ssub.s32 %s27, 2
      %s40 = sadd.s32 1, %s35
      %p41 = scmp.ge.s32.totalorder %s40, 1
      %s42 = scalar_select %p41, 0, %s40
      %s43 = sadd.s32 1, %s34
      %s44 = scalar_select %p41, %s43, %s34
      %p45 = scmp.ge.s32.totalorder %s44, 2
      %s46 = scalar_select %p45, 0, %s44
      %s47 = ssub.s32 %s34, %s46
      %s48 = ssub.s32 %s35, %s42
      %s49 = sor.u32 %s47, %s48
      %p50 = scmp.eq.s32.totalorder %s49, 0
      %s52 = sadd.s32 %s51, 1
      %s53 = scalar_select %p50, %s51, %s52
      %p56 = pneg %p50
      %p57 = scmp.eq.s32.totalorder %s27, 1
      %p58 = por %p56, %p57
      %p59 = scmp.ne.s32.totalorder %s51, %s54
      %p60 = scmp.eq.s32.totalorder %s27, 0
      %p61 = por %p59, %p60
      %p62 = scmp.ne.s32.totalorder %s51, %s54
      %p63 = scmp.eq.s32.totalorder %s32, 1
      %p64 = por %p62, %p63
      %p65 = scmp.ne.s32.totalorder %s54, %s55
      %p66 = scmp.eq.s32.totalorder %s32, 0
      %p67 = por %p65, %p66
      %p68 = scmp.ne.s32.totalorder %s54, %s55
      %p69 = scmp.eq.s32.totalorder %s33, 1
      %p70 = por %p68, %p69
      %p72 = scmp.ne.s32.totalorder %s55, %s71
      %p73 = scmp.eq.s32.totalorder %s33, 0
      %p74 = por %p72, %p73
      %s75 = ssub.s32 %s34, %s46
      %p76 = scmp.eq.s32.totalorder %s75, 0
      %s78 = sadd.s32 %s77, 1
      %s79 = scalar_select %p76, %s77, %s78
      %p82 = pneg %p76
      %p83 = scmp.eq.s32.totalorder %s27, 1
      %p84 = por %p82, %p83
      %p85 = scmp.ne.s32.totalorder %s77, %s80
      %p86 = scmp.eq.s32.totalorder %s27, 0
      %p87 = por %p85, %p86
      %p88 = scmp.ne.s32.totalorder %s77, %s80
      %p89 = scmp.eq.s32.totalorder %s32, 1
      %p90 = por %p88, %p89
      %p91 = scmp.ne.s32.totalorder %s80, %s81
      %p92 = scmp.eq.s32.totalorder %s32, 0
      %p93 = por %p91, %p92
      %p94 = scmp.ne.s32.totalorder %s80, %s81
      %p95 = scmp.eq.s32.totalorder %s33, 1
      %p96 = por %p94, %p95
      %p98 = scmp.ne.s32.totalorder %s81, %s97
      %p99 = scmp.eq.s32.totalorder %s33, 0
      %p100 = por %p98, %p99
      %s101 = ssub.s32 %s34, %s46
      %p102 = scmp.eq.s32.totalorder %s101, 0
      %s104 = sadd.s32 %s103, 1
      %s105 = scalar_select %p102, %s103, %s104
      %p108 = pneg %p102
      %p109 = scmp.eq.s32.totalorder %s27, 1
      %p110 = por %p108, %p109
      %p111 = scmp.ne.s32.totalorder %s103, %s106
      %p112 = scmp.eq.s32.totalorder %s27, 0
      %p113 = por %p111, %p112
      %p114 = scmp.ne.s32.totalorder %s103, %s106
      %p115 = scmp.eq.s32.totalorder %s32, 1
      %p116 = por %p114, %p115
      %p117 = scmp.ne.s32.totalorder %s106, %s107
      %p118 = scmp.eq.s32.totalorder %s32, 0
      %p119 = por %p117, %p118
      %p120 = scmp.ne.s32.totalorder %s106, %s107
      %p121 = scmp.eq.s32.totalorder %s33, 1
      %p122 = por %p120, %p121
      %p124 = scmp.ne.s32.totalorder %s107, %s123
      %p125 = scmp.eq.s32.totalorder %s33, 0
      %p126 = por %p124, %p125
      %s127 = ssub.s32 %s34, %s46
      %p128 = scmp.eq.s32.totalorder %s127, 0
      %s130 = sadd.s32 %s129, 1
      %s131 = scalar_select %p128, %s129, %s130
      %p134 = pneg %p128
      %p135 = scmp.eq.s32.totalorder %s27, 1
      %p136 = por %p134, %p135
      %p137 = scmp.ne.s32.totalorder %s129, %s132
      %p138 = scmp.eq.s32.totalorder %s27, 0
      %p139 = por %p137, %p138
      %p140 = scmp.ne.s32.totalorder %s129, %s132
      %p141 = scmp.eq.s32.totalorder %s32, 1
      %p142 = por %p140, %p141
      %p143 = scmp.ne.s32.totalorder %s132, %s133
      %p144 = scmp.eq.s32.totalorder %s32, 0
      %p145 = por %p143, %p144
      %p146 = scmp.ne.s32.totalorder %s132, %s133
      %p147 = scmp.eq.s32.totalorder %s33, 1
      %p148 = por %p146, %p147
      %p150 = scmp.ne.s32.totalorder %s133, %s149
      %p151 = scmp.eq.s32.totalorder %s33, 0
      %p152 = por %p150, %p151
      %s154 = sadd.s32 %s153, 1
      %p157 = scmp.eq.s32.totalorder %s27, 1
      %p158 = scmp.ne.s32.totalorder %s153, %s155
      %p159 = scmp.eq.s32.totalorder %s27, 0
      %p160 = por %p158, %p159
      %p161 = scmp.ne.s32.totalorder %s153, %s155
      %p162 = scmp.eq.s32.totalorder %s32, 1
      %p163 = por %p161, %p162
      %p164 = scmp.ne.s32.totalorder %s155, %s156
      %p165 = scmp.eq.s32.totalorder %s32, 0
      %p166 = por %p164, %p165
      %p167 = scmp.ne.s32.totalorder %s155, %s156
      %p168 = scmp.eq.s32.totalorder %s33, 1
      %p169 = por %p167, %p168
      %p171 = scmp.ne.s32.totalorder %s156, %s170
      %p172 = scmp.eq.s32.totalorder %s33, 0
      %p173 = por %p171, %p172
      %s175 = sadd.s32 %s174, 1
      %p178 = scmp.eq.s32.totalorder %s27, 1
      %p179 = scmp.ne.s32.totalorder %s174, %s176
      %p180 = scmp.eq.s32.totalorder %s27, 0
      %p181 = por %p179, %p180
      %p182 = scmp.ne.s32.totalorder %s174, %s176
      %p183 = scmp.eq.s32.totalorder %s32, 1
      %p184 = por %p182, %p183
      %p185 = scmp.ne.s32.totalorder %s176, %s177
      %p186 = scmp.eq.s32.totalorder %s32, 0
      %p187 = por %p185, %p186
      %p188 = scmp.ne.s32.totalorder %s176, %s177
      %p189 = scmp.eq.s32.totalorder %s33, 1
      %p190 = por %p188, %p189
      %p192 = scmp.ne.s32.totalorder %s177, %s191
      %p193 = scmp.eq.s32.totalorder %s33, 0
      %p194 = por %p192, %p193
      %s195 = ssub.s32 %s34, %s46
      %s196 = ssub.s32 %s35, %s42
      %s197 = sor.u32 %s195, %s196
      %p198 = scmp.eq.s32.totalorder %s197, 0
      %s200 = sadd.s32 %s199, 1
      %s201 = scalar_select %p198, %s199, %s200
      %p204 = pneg %p198
      %p205 = scmp.eq.s32.totalorder %s27, 1
      %p206 = por %p204, %p205
      %p207 = scmp.ne.s32.totalorder %s199, %s202
      %p208 = scmp.eq.s32.totalorder %s27, 0
      %p209 = por %p207, %p208
      %p210 = scmp.ne.s32.totalorder %s199, %s202
      %p211 = scmp.eq.s32.totalorder %s32, 1
      %p212 = por %p210, %p211
      %p213 = scmp.ne.s32.totalorder %s202, %s203
      %p214 = scmp.eq.s32.totalorder %s32, 0
      %p215 = por %p213, %p214
      %p216 = scmp.ne.s32.totalorder %s202, %s203
      %p217 = scmp.eq.s32.totalorder %s33, 1
      %p218 = por %p216, %p217
      %p220 = scmp.ne.s32.totalorder %s203, %s219
      %p221 = scmp.eq.s32.totalorder %s33, 0
      %p222 = por %p220, %p221
      %s223 = ssub.s32 %s34, %s46
      %s224 = ssub.s32 %s35, %s42
      %s225 = sor.u32 %s223, %s224
      %p226 = scmp.eq.s32.totalorder %s225, 0
      %s228 = sadd.s32 %s227, 1
      %s229 = scalar_select %p226, %s227, %s228
      %p232 = pneg %p226
      %p233 = scmp.eq.s32.totalorder %s27, 1
      %p234 = por %p232, %p233
      %p235 = scmp.ne.s32.totalorder %s227, %s230
      %p236 = scmp.eq.s32.totalorder %s27, 0
      %p237 = por %p235, %p236
      %p238 = scmp.ne.s32.totalorder %s227, %s230
      %p239 = scmp.eq.s32.totalorder %s32, 1
      %p240 = por %p238, %p239
      %p241 = scmp.ne.s32.totalorder %s230, %s231
      %p242 = scmp.eq.s32.totalorder %s32, 0
      %p243 = por %p241, %p242
      %p244 = scmp.ne.s32.totalorder %s230, %s231
      %p245 = scmp.eq.s32.totalorder %s33, 1
      %p246 = por %p244, %p245
      %p248 = scmp.ne.s32.totalorder %s231, %s247
      %p249 = scmp.eq.s32.totalorder %s33, 0
      %p250 = por %p248, %p249
      %p251 = scmp.le.s32.totalorder 1, %s27
      %p252 = scmp.lt.s32.totalorder %s27, 3
      %p253 = pnand %p251, %p252
      %p254 = pneg %p253
      // Predicated region
      $region9: #{tpu_custom_call.1} parent=5 // pred_check
        _
      $region10: #{tpu_custom_call.1} parent=5 // pred_check_branch
        %256 = sbr.rel (%p253) target = $region12
      $region11: #{tpu_custom_call.1} parent=5 // pred_region
        %s257 = ssub.s32 %s27, 1
        // Predicated region
        $region13: #{tpu_custom_call.1} parent=11 // pred_check
          %p258 = pneg %p166
        $region14: #{tpu_custom_call.1} parent=11 // pred_check_branch
          %260 = sbr.rel (%p258) target = $region16
        $region15: #{tpu_custom_call.1} parent=11 // pred_region
          %262 = vsyncadd [#allocation9], 0
          %s264 = sshll.u32 %s4, 4
          %s265 = int_to_ptr.hbm [resolvable:$true] %s264
          %s266 = sshll.u32 [#allocation8], 4
          %s267 = int_to_ptr.vmem [resolvable:$true] %s266
          %269 = dma.hbm_to_vmem [thread:$0]  %s265, 128, %s267, [#allocation9]
        $region16: #{tpu_custom_call.1} parent=11 // pred_fallthru
          _
        // Predicated region
        $region17: #{tpu_custom_call.1} parent=11 // pred_check
          %p270 = pneg %p187
        $region18: #{tpu_custom_call.1} parent=11 // pred_check_branch
          %272 = sbr.rel (%p270) target = $region20
        $region19: #{tpu_custom_call.1} parent=11 // pred_region
          %274 = vsyncadd [#allocation9], 0
          %s275 = sshll.u32 %s5, 4
          %s276 = int_to_ptr.hbm [resolvable:$true] %s275
          %s277 = sshll.u32 [#allocation10], 4
          %s278 = int_to_ptr.vmem [resolvable:$true] %s277
          %283 = dma.hbm_to_vmem [thread:$0]  %s276, 512, %s278, [#allocation9], 128, 128, 8
        $region20: #{tpu_custom_call.1} parent=11 // pred_fallthru
          _
      $region12: #{tpu_custom_call.1} parent=5 // pred_fallthru
        _
      %p284 = scmp.lt.s32.totalorder %s27, 2
      // Predicated region
      $region21: #{tpu_custom_call.1} parent=5 // pred_check
        %p285 = pneg %p284
      $region22: #{tpu_custom_call.1} parent=5 // pred_check_branch
        %287 = sbr.rel (%p285) target = $region24
      $region23: #{tpu_custom_call.1} parent=5 // pred_region
        // Predicated region
        $region25: #{tpu_custom_call.1} parent=23 // pred_check
          %p288 = pneg %p61
        $region26: #{tpu_custom_call.1} parent=23 // pred_check_branch
          %290 = sbr.rel (%p288) target = $region28
        $region27: #{tpu_custom_call.1} parent=23 // pred_region
          %s291 = sand.u32 %s51, 1
          %s292 = scalar_lea.sflag [#allocation3], %s291
          %s293 = sand.u32 %s51, 1
          %s294 = smul.addr %s293, 8
          %s295 = scalar_lea.vmem [#allocation2], %s294
          %297 = vsyncadd %s292, 0
          %s298 = sadd.s32 %s35, %s34
          %s299 = smul.addr %s298, 8
          %s300 = scalar_lea.hbm %s0, %s299
          %s302 = sshll.u32 %s300, 4
          %s303 = int_to_ptr.hbm [resolvable:$true] %s302
          %s304 = sshll.u32 %s295, 4
          %s305 = int_to_ptr.vmem [resolvable:$true] %s304
          %307 = dma.hbm_to_vmem [thread:$0]  %s303, 128, %s305, %s292
        $region28: #{tpu_custom_call.1} parent=23 // pred_fallthru
          _
        // Predicated region
        $region29: #{tpu_custom_call.1} parent=23 // pred_check
          %p308 = pneg %p87
        $region30: #{tpu_custom_call.1} parent=23 // pred_check_branch
          %310 = sbr.rel (%p308) target = $region32
        $region31: #{tpu_custom_call.1} parent=23 // pred_region
          %s311 = sand.u32 %s27, 1
          %s312 = scalar_lea.sflag [#allocation6], %s311
          %s313 = sand.u32 %s77, 1
          %s314 = smul.addr %s313, 8
          %s315 = scalar_lea.vmem [#allocation5], %s314
          %317 = vsyncadd %s312, 0
          %s318 = smul.addr %s34, 8
          %s319 = scalar_lea.hbm %s1, %s318
          %s321 = sshll.u32 %s319, 4
          %s322 = int_to_ptr.hbm [resolvable:$true] %s321
          %s323 = sshll.u32 %s315, 4
          %s324 = int_to_ptr.vmem [resolvable:$true] %s323
          %326 = dma.hbm_to_vmem [thread:$0]  %s322, 128, %s324, %s312
        $region32: #{tpu_custom_call.1} parent=23 // pred_fallthru
          _
        // Predicated region
        $region33: #{tpu_custom_call.1} parent=23 // pred_check
          %p327 = pneg %p113
        $region34: #{tpu_custom_call.1} parent=23 // pred_check_branch
          %329 = sbr.rel (%p327) target = $region36
        $region35: #{tpu_custom_call.1} parent=23 // pred_region
          %s330 = sand.u32 %s27, 1
          %s331 = scalar_lea.sflag [#allocation6], %s330
          %s332 = sand.u32 %s103, 1
          %s333 = smul.addr %s332, 8
          %s334 = scalar_lea.vmem [#allocation7], %s333
          %336 = vsyncadd %s331, 0
          %s337 = smul.addr %s34, 8
          %s338 = scalar_lea.hbm %s2, %s337
          %s340 = sshll.u32 %s338, 4
          %s341 = int_to_ptr.hbm [resolvable:$true] %s340
          %s342 = sshll.u32 %s334, 4
          %s343 = int_to_ptr.vmem [resolvable:$true] %s342
          %345 = dma.hbm_to_vmem [thread:$0]  %s341, 128, %s343, %s331
        $region36: #{tpu_custom_call.1} parent=23 // pred_fallthru
          _
        // Predicated region
        $region37: #{tpu_custom_call.1} parent=23 // pred_check
          %p346 = pneg %p139
        $region38: #{tpu_custom_call.1} parent=23 // pred_check_branch
          %348 = sbr.rel (%p346) target = $region40
        $region39: #{tpu_custom_call.1} parent=23 // pred_region
          %p349 = scmp.lt.s32.totalorder %s34, 1
          %s350 = scalar_select %p349, %s34, 1
          %s351 = scalar_lea.vmem %s3, %s350
        $region40: #{tpu_custom_call.1} parent=23 // pred_fallthru
          _
      $region24: #{tpu_custom_call.1} parent=5 // pred_fallthru
        _
      %p352 = scmp.le.s32.totalorder 1, %s27
      %p353 = scmp.lt.s32.totalorder %s27, 3
      %p354 = pnand %p352, %p353
      %p355 = pneg %p354
      // Predicated region
      $region41: #{tpu_custom_call.1} parent=5 // pred_check
        _
      $region42: #{tpu_custom_call.1} parent=5 // pred_check_branch
        %357 = sbr.rel (%p354) target = $region44
      $region43: #{tpu_custom_call.1} parent=5 // pred_region
        %s358 = ssub.s32 %s27, 1
        %s359 = sand.u32 %s54, 1
        %s360 = scalar_lea.sflag [#allocation3], %s359
        %s361 = sand.u32 %s54, 1
        %s362 = smul.addr %s361, 8
        %s363 = scalar_lea.vmem [#allocation2], %s362
        // Predicated region
        $region45: #{tpu_custom_call.1} parent=43 // pred_check
          %p364 = pneg %p67
        $region46: #{tpu_custom_call.1} parent=43 // pred_check_branch
          %366 = sbr.rel (%p364) target = $region48
        $region47: #{tpu_custom_call.1} parent=43 // pred_region
          %368 = dma.done %s360, 128
        $region48: #{tpu_custom_call.1} parent=43 // pred_fallthru
          _
        %s369 = sand.u32 %s32, 1
        %s370 = scalar_lea.sflag [#allocation6], %s369
        %s371 = sand.u32 %s80, 1
        %s372 = smul.addr %s371, 8
        %s373 = scalar_lea.vmem [#allocation5], %s372
        // Predicated region
        $region49: #{tpu_custom_call.1} parent=43 // pred_check
          %p374 = pneg %p93
        $region50: #{tpu_custom_call.1} parent=43 // pred_check_branch
          %376 = sbr.rel (%p374) target = $region52
        $region51: #{tpu_custom_call.1} parent=43 // pred_region
          %378 = dma.done %s370, 128
        $region52: #{tpu_custom_call.1} parent=43 // pred_fallthru
          _
        %s379 = sand.u32 %s32, 1
        %s380 = scalar_lea.sflag [#allocation6], %s379
        %s381 = sand.u32 %s106, 1
        %s382 = smul.addr %s381, 8
        %s383 = scalar_lea.vmem [#allocation7], %s382
        // Predicated region
        $region53: #{tpu_custom_call.1} parent=43 // pred_check
          %p384 = pneg %p119
        $region54: #{tpu_custom_call.1} parent=43 // pred_check_branch
          %386 = sbr.rel (%p384) target = $region56
        $region55: #{tpu_custom_call.1} parent=43 // pred_region
          %388 = dma.done %s380, 128
        $region56: #{tpu_custom_call.1} parent=43 // pred_fallthru
          _
        // Predicated region
        $region57: #{tpu_custom_call.1} parent=43 // pred_check
          %p389 = pneg %p166
        $region58: #{tpu_custom_call.1} parent=43 // pred_check_branch
          %391 = sbr.rel (%p389) target = $region60
        $region59: #{tpu_custom_call.1} parent=43 // pred_region
          %393 = dma.done [#allocation9], 128
        $region60: #{tpu_custom_call.1} parent=43 // pred_fallthru
          _
        // Predicated region
        $region61: #{tpu_custom_call.1} parent=43 // pred_check
          %p394 = pneg %p187
        $region62: #{tpu_custom_call.1} parent=43 // pred_check_branch
          %396 = sbr.rel (%p394) target = $region64
        $region63: #{tpu_custom_call.1} parent=43 // pred_region
          %398 = dma.done [#allocation9], 512
        $region64: #{tpu_custom_call.1} parent=43 // pred_fallthru
          _
        %s399 = sand.u32 %s54, 1
        %s400 = scalar_lea.sflag [#allocation3], %s399
        %s401 = sand.u32 %s54, 1
        %s402 = smul.addr %s401, 8
        %s403 = scalar_lea.vmem [#allocation2], %s402
        %p404 = pneg %p67
        %p405 = pneg %p64
        %s406 = sand.u32 %s32, 1
        %s407 = scalar_lea.sflag [#allocation6], %s406
        %s408 = sand.u32 %s80, 1
        %s409 = smul.addr %s408, 8
        %s410 = scalar_lea.vmem [#allocation5], %s409
        %p411 = pneg %p93
        %p412 = pneg %p90
        %s413 = sand.u32 %s32, 1
        %s414 = scalar_lea.sflag [#allocation6], %s413
        %s415 = sand.u32 %s106, 1
        %s416 = smul.addr %s415, 8
        %s417 = scalar_lea.vmem [#allocation7], %s416
        %p418 = pneg %p119
        %p419 = pneg %p116
        %p420 = scmp.lt.s32.totalorder %s36, 1
        %s421 = scalar_select %p420, %s36, 1
        %s422 = scalar_lea.vmem %s3, %s421
        %p423 = pneg %p145
        %p424 = pneg %p142
        %p425 = pneg %p166
        %p426 = pneg %p163
        %p427 = pneg %p187
        %p428 = pneg %p184
        %p429 = pneg %p215
        %p430 = pneg %p212
        %s431 = sand.u32 %s202, 1
        %s432 = scalar_lea.sflag [#allocation4], %s431
        %s433 = sand.u32 %s202, 1
        %s434 = smul.addr %s433, 8
        %s435 = scalar_lea.vmem [#allocation11], %s434
        %p436 = pneg %p243
        %p437 = pneg %p240
        %s438 = sand.u32 %s230, 1
        %s439 = scalar_lea.sflag [#allocation13], %s438
        %s440 = sand.u32 %s230, 1
        %s441 = smul.addr %s440, 32
        %s442 = scalar_lea.vmem [#allocation12], %s441
        %p443 = scmp.lt.s32.totalorder %s36, 1
        %s444 = scalar_select %p443, %s36, 1
        %s445 = scalar_lea.vmem %s3, %s444
        %v446 = vld [vmem:[%s363] sm:$0xff]
        %v447 = vld [vmem:[%s373] sm:$0xff]
        %v448 = vld [vmem:[%s383] sm:$0xff]
        %v449 = vld [vmem:[%s445] sm:$0x1]
        %v450 = vld [vmem:[#allocation8] sm:$0xff]
        %vm451 = vcmask 64512
        %v453 = vsel %vm451, %v446, 0
        %455 = vmatpush.msra.mxu0 0.0
        %456 = vmatpush.msra.mxu0 0.0
        %457 = vmatpush.msra.mxu0 0.0
        %458 = vmatpush.msra.mxu0 0.0
        %459 = vmatpush.msra.mxu0 0.0
        %460 = vmatpush.msra.mxu0 0.0
        %461 = vmatpush.msra.mxu0 0.0
        %462 = vmatpush.msra.mxu0 0.0
        %463 = vmatpush.msra.mxu0 0.0
        %464 = vmatpush.msra.mxu0 0.0
        %465 = vmatpush.msra.mxu0 0.0
        %466 = vmatpush.msra.mxu0 0.0
        %467 = vmatpush.msra.mxu0 0.0
        %468 = vmatpush.msra.mxu0 0.0
        %469 = vmatpush.msra.mxu0 0.0
        %470 = vmatpush.msra.mxu0 %v450
        %471 = vmatmul.f32.gmra.mxu0 %v453
        %v472 = vpop.f32.mrf.mxu0
        %v473 = vadd.f32 0.0, %v472
        %474 = vdwg.mxu0
        %v475 = vmul.f32 %v473, 0.35355338
        %477 = vrot.lane.b32.xlu0 %v475, 120
        %v478 = vpop.permute.xlu0 %477
        %479 = vrot.lane.b32.xlu0 %v475, 112
        %v480 = vpop.permute.xlu0 %479
        %481 = vrot.lane.b32.xlu0 %v475, 104
        %v482 = vpop.permute.xlu0 %481
        %v484 = vperm.slane %v449, 0
        %v486 = vsel %vm451, %v475, 0
        %v488 = vsel %vm451, %v478, 0
        %v490 = vsel %vm451, %v480, 0
        %v492 = vsel %vm451, %v482, 0
        %v495 = vsel %vm451, %v447, 0
        %497 = vmatpush.xpose.msra.mxu0 0.0
        %498 = vmatpush.xpose.msra.mxu0 0.0
        %499 = vmatpush.xpose.msra.mxu0 0.0
        %500 = vmatpush.xpose.msra.mxu0 0.0
        %501 = vmatpush.xpose.msra.mxu0 0.0
        %502 = vmatpush.xpose.msra.mxu0 0.0
        %503 = vmatpush.xpose.msra.mxu0 0.0
        %504 = vmatpush.xpose.msra.mxu0 0.0
        %505 = vmatpush.xpose.msra.mxu0 0.0
        %506 = vmatpush.xpose.msra.mxu0 0.0
        %507 = vmatpush.xpose.msra.mxu0 0.0
        %508 = vmatpush.xpose.msra.mxu0 0.0
        %509 = vmatpush.xpose.msra.mxu0 0.0
        %510 = vmatpush.xpose.msra.mxu0 0.0
        %511 = vmatpush.xpose.msra.mxu0 0.0
        %512 = vmatpush.xpose.msra.mxu0 %v495
        %513 = vmatmul.f32.gmra.mxu0 %v486
        %v514 = vpop.f32.mrf.mxu0
        %v515 = vadd.f32 %v484, %v514
        %516 = vmatmul.f32.gmra.mxu0 %v488
        %v517 = vpop.f32.mrf.mxu0
        %v518 = vadd.f32 %v484, %v517
        %519 = vmatmul.f32.gmra.mxu0 %v490
        %v520 = vpop.f32.mrf.mxu0
        %v521 = vadd.f32 %v484, %v520
        %522 = vmatmul.f32.gmra.mxu0 %v492
        %v523 = vpop.f32.mrf.mxu0
        %v524 = vadd.f32 %v484, %v523
        %525 = vdwg.mxu0
        %526 = vst.msk [vmem:[%s442] sm:$0xff] %vm451, %v515
        %527 = vst.msk [vmem:[%s442 + $0x8] sm:$0xff] %vm451, %v518
        %528 = vst.msk [vmem:[%s442 + $0x10] sm:$0xff] %vm451, %v521
        %529 = vst.msk [vmem:[%s442 + $0x18] sm:$0xff] %vm451, %v524
        %v530 = vld [vmem:[%s442] sm:$0xff]
        %v531 = vld [vmem:[%s442 + $0x8] sm:$0xff]
        %v532 = vld [vmem:[%s442 + $0x10] sm:$0xff]
        %v533 = vld [vmem:[%s442 + $0x18] sm:$0xff]
        %v535 = vsel %vm451, %v530, 0
        %v538 = vsel %vm451, %v531, 0
        %v541 = vsel %vm451, %v532, 0
        %v544 = vsel %vm451, %v533, 0
        %546 = vmatpush.msra.mxu0 0.0
        %547 = vmatpush.msra.mxu0 0.0
        %548 = vmatpush.msra.mxu0 0.0
        %549 = vmatpush.msra.mxu0 0.0
        %550 = vmatpush.msra.mxu0 0.0
        %551 = vmatpush.msra.mxu0 0.0
        %552 = vmatpush.msra.mxu0 0.0
        %553 = vmatpush.msra.mxu0 0.0
        %554 = vmatpush.msra.mxu0 0.0
        %555 = vmatpush.msra.mxu0 0.0
        %556 = vmatpush.msra.mxu0 0.0
        %557 = vmatpush.msra.mxu0 0.0
        %558 = vmatpush.msra.mxu0 0.0
        %559 = vmatpush.msra.mxu0 0.0
        %560 = vmatpush.msra.mxu0 0.0
        %561 = vmatpush.msra.mxu0 %v448
        %562 = vmatmul.f32.gmra.mxu0 %v535
        %v563 = vpop.f32.mrf.mxu0
        %v564 = vadd.f32 0.0, %v563
        %565 = vmatmul.f32.gmra.mxu0 %v538
        %v566 = vpop.f32.mrf.mxu0
        %v567 = vadd.f32 0.0, %v566
        %568 = vmatmul.f32.gmra.mxu0 %v541
        %v569 = vpop.f32.mrf.mxu0
        %v570 = vadd.f32 0.0, %v569
        %571 = vmatmul.f32.gmra.mxu0 %v544
        %v572 = vpop.f32.mrf.mxu0
        %v573 = vadd.f32 0.0, %v572
        %574 = vdwg.mxu0
        %576 = vrot.lane.b32.xlu0 %v567, 8
        %v577 = vpop.permute.xlu0 %576
        %580 = vrot.lane.b32.xlu0 %v570, 16
        %v581 = vpop.permute.xlu0 %580
        %584 = vrot.lane.b32.xlu0 %v573, 24
        %v585 = vpop.permute.xlu0 %584
        %v587 = vsel %vm451, %v564, %v577
        %vm588 = vcmask 130048
        %v589 = vsel %vm588, %v587, %v581
        %vm590 = vcmask 195584
        %v591 = vsel %vm590, %v589, %v585
        %v592 = vld [vmem:[#allocation10] sm:$0xff]
        %v593 = vld [vmem:[#allocation10 + $0x8] sm:$0xff]
        %v594 = vld [vmem:[#allocation10 + $0x10] sm:$0xff]
        %v595 = vld [vmem:[#allocation10 + $0x18] sm:$0xff]
        %vm596 = vcmask 261120
        %v598 = vsel %vm596, %v591, 0
        %600 = vmatpush.msra.mxu0 0.0
        %601 = vmatpush.msra.mxu0 0.0
        %602 = vmatpush.msra.mxu0 0.0
        %603 = vmatpush.msra.mxu0 0.0
        %604 = vmatpush.msra.mxu0 0.0
        %605 = vmatpush.msra.mxu0 0.0
        %606 = vmatpush.msra.mxu0 0.0
        %607 = vmatpush.msra.mxu0 0.0
        %608 = vmatpush.msra.mxu0 0.0
        %609 = vmatpush.msra.mxu0 0.0
        %610 = vmatpush.msra.mxu0 0.0
        %611 = vmatpush.msra.mxu0 0.0
        %612 = vmatpush.msra.mxu0 %v595
        %613 = vmatpush.msra.mxu0 %v594
        %614 = vmatpush.msra.mxu0 %v593
        %615 = vmatpush.msra.mxu0 %v592
        %616 = vmatmul.f32.gmra.mxu0 %v598
        %v617 = vpop.f32.mrf.mxu0
        %v618 = vadd.f32 0.0, %v617
        %619 = vdwg.mxu0
        %620 = vst.msk [vmem:[%s435] sm:$0xff] %vm596, %v618
        %s621 = sand.u32 %s202, 1
        %s622 = scalar_lea.sflag [#allocation4], %s621
        %s623 = sand.u32 %s202, 1
        %s624 = smul.addr %s623, 8
        %s625 = scalar_lea.vmem [#allocation11], %s624
        %s626 = sand.u32 %s230, 1
        %s627 = scalar_lea.sflag [#allocation13], %s626
        %s628 = sand.u32 %s230, 1
        %s629 = smul.addr %s628, 32
        %s630 = scalar_lea.vmem [#allocation12], %s629
        // Predicated region
        $region65: #{tpu_custom_call.1} parent=43 // pred_check
          %p631 = pneg %p212
        $region66: #{tpu_custom_call.1} parent=43 // pred_check_branch
          %633 = sbr.rel (%p631) target = $region68
        $region67: #{tpu_custom_call.1} parent=43 // pred_region
          %635 = vsyncadd %s622, 0
          %s636 = sadd.s32 %s37, %s36
          %s637 = smul.addr %s636, 8
          %s638 = scalar_lea.hbm %s6, %s637
          %s640 = sshll.u32 %s625, 4
          %s641 = int_to_ptr.vmem [resolvable:$true] %s640
          %s642 = sshll.u32 %s638, 4
          %s643 = int_to_ptr.hbm [resolvable:$true] %s642
          %645 = dma.vmem_to_hbm [thread:$0]  %s641, 128, %s643, %s622
        $region68: #{tpu_custom_call.1} parent=43 // pred_fallthru
          _
        // Predicated region
        $region69: #{tpu_custom_call.1} parent=43 // pred_check
          %p646 = pneg %p240
        $region70: #{tpu_custom_call.1} parent=43 // pred_check_branch
          %648 = sbr.rel (%p646) target = $region72
        $region71: #{tpu_custom_call.1} parent=43 // pred_region
          %650 = vsyncadd %s627, 0
          %s651 = smul.addr %s36, 4
          %s652 = sadd.s32 %s37, %s651
          %s653 = smul.addr %s652, 8
          %s654 = scalar_lea.hbm %s7, %s653
          %s655 = sshll.u32 %s630, 4
          %s656 = int_to_ptr.vmem [resolvable:$true] %s655
          %s657 = sshll.u32 %s654, 4
          %s658 = int_to_ptr.hbm [resolvable:$true] %s657
          %663 = dma.vmem_to_hbm [thread:$0]  %s656, 512, %s658, %s627, 128, 128, 8
        $region72: #{tpu_custom_call.1} parent=43 // pred_fallthru
          _
      $region44: #{tpu_custom_call.1} parent=5 // pred_fallthru
        _
      %p664 = scmp.le.s32.totalorder 2, %s27
      // Predicated region
      $region73: #{tpu_custom_call.1} parent=5 // pred_check
        %p665 = pneg %p664
      $region74: #{tpu_custom_call.1} parent=5 // pred_check_branch
        %667 = sbr.rel (%p665) target = $region76
      $region75: #{tpu_custom_call.1} parent=5 // pred_region
        %s668 = ssub.s32 %s27, 2
        // Predicated region
        $region77: #{tpu_custom_call.1} parent=75 // pred_check
          %p669 = pneg %p218
        $region78: #{tpu_custom_call.1} parent=75 // pred_check_branch
          %671 = sbr.rel (%p669) target = $region80
        $region79: #{tpu_custom_call.1} parent=75 // pred_region
          %s672 = sand.u32 %s203, 1
          %s673 = scalar_lea.sflag [#allocation4], %s672
          %s674 = sand.u32 %s203, 1
          %s675 = smul.addr %s674, 8
          %s676 = scalar_lea.vmem [#allocation11], %s675
          %678 = dma.done %s673, 128
        $region80: #{tpu_custom_call.1} parent=75 // pred_fallthru
          _
        // Predicated region
        $region81: #{tpu_custom_call.1} parent=75 // pred_check
          %p679 = pneg %p246
        $region82: #{tpu_custom_call.1} parent=75 // pred_check_branch
          %681 = sbr.rel (%p679) target = $region84
        $region83: #{tpu_custom_call.1} parent=75 // pred_region
          %s682 = sand.u32 %s231, 1
          %s683 = scalar_lea.sflag [#allocation13], %s682
          %s684 = sand.u32 %s231, 1
          %s685 = smul.addr %s684, 32
          %s686 = scalar_lea.vmem [#allocation12], %s685
          %688 = dma.done %s683, 512
        $region84: #{tpu_custom_call.1} parent=75 // pred_fallthru
          _
      $region76: #{tpu_custom_call.1} parent=5 // pred_fallthru
        _
    $region6: #{tpu_custom_call.1} parent=1 // loop_footer
      %s31 = sadd.s32 1, %s27
    $region7: #{tpu_custom_call.1} parent=1 // loop_footer_branch
      %26 = sbr.rel target = $region3
    $region8: #{tpu_custom_call.1} parent=1 // loop_exit
      _
    %689 = vsyncpa [#allocation3], 1
    %s690 = scalar_lea.sflag [#allocation3], 1
    %691 = vsyncpa %s690, 1
    %692 = vsyncpa [#allocation6], 1
    %s693 = scalar_lea.sflag [#allocation6], 1
    %694 = vsyncpa %s693, 1
    %695 = vsyncpa [#allocation9], 1
    %696 = vsyncpa [#allocation4], 1
    %s697 = scalar_lea.sflag [#allocation4], 1
    %698 = vsyncpa %s697, 1
    %699 = vsyncpa [#allocation13], 1
    %s700 = scalar_lea.sflag [#allocation13], 1
    %701 = vsyncpa %s700, 1

</llo_original>
